<compile_context>
chip_gen: v7x
topology: tpu7x:2x2x1
jax: 0.10.0
libtpu: 0.0.40
codegen_flags: <defaults>
</compile_context>

<pallas_src>
import functools

import jax
import jax.numpy as jnp
from jax.experimental import pallas as pl
from jax.experimental.pallas import tpu as pltpu

LN_EPS = 1e-5  # PyTorch nn.LayerNorm default


def _round_up(a, b):
    return (a + b - 1) // b * b


@functools.lru_cache(maxsize=1)
def _tpu_config():
    """(vmem_capacity_bytes, lane_align) for the local TPU generation."""
    kind = ""
    try:
        kind = getattr(jax.devices()[0], "device_kind", "") or ""
    except Exception:
        pass
    kind = kind.lower()
    try:
        vmem = int(pltpu.get_tpu_info().vmem_capacity_bytes)
    except Exception:
        vmem = (64 << 20) if "v7" in kind else (128 << 20)
    vmem = max(32 << 20, min(vmem, 128 << 20))
    # v5e (and older) MXU is 128-wide; v6e/v7x are 256-wide.
    lane_align = 128 if any(v in kind for v in ("v2", "v3", "v4", "v5")) else 256
    return vmem, lane_align


def _plan_tiles(N, D, H, x_bytes, w_bytes, block_rows, block_hidden):
    """Static tiling plan: (tm, th, Dp, Hp, Np, vmem_limit_bytes)."""
    vmem_bytes, lane_align = _tpu_config()

    # Leave headroom for compiler-internal scratch: ~48 MiB on v7x, ~96 MiB on v5e/v6e.
    vmem_limit = max(32 << 20, min(int(vmem_bytes * 3 // 4), 100 << 20))

    # Pad D/H only when required; when padding, align to the MXU width.
    Dp = D if D % 128 == 0 else _round_up(D, lane_align)
    Hp = H if H % 128 == 0 else _round_up(H, lane_align)

    Np8 = _round_up(max(N, 1), 8)

    if block_rows is None:
        if vmem_bytes <= (64 << 20):      # v7x: half the VMEM of v5e/v6e
            block_rows = 256
        elif lane_align >= 256:           # v6e: push firmly compute-bound
            block_rows = 512
        else:                             # v5e: MXU-bound already
            block_rows = 256
    tm = min(_round_up(block_rows, 8), Np8)

    # >= 2 row tiles so the "parallel" axis can feed both v7x TensorCores.
    if Np8 // tm < 2 and Np8 >= 16:
        tm = max(8, (Np8 // 2) // 8 * 8)

    def est(tm_, th_):
        e = 2 * tm_ * Dp * x_bytes                    # x tiles (double buffered)
        e += 2 * tm_ * Dp * x_bytes                   # output tiles
        e += tm_ * Dp * 4                             # f32 accumulator scratch
        e += 2 * (Dp * th_ + th_ * Dp) * w_bytes      # W1 / W2 chunks
        e += 2 * (th_ + 3 * Dp) * 4                   # b1 / b2 / gamma / beta
        return e

    if block_hidden is None:
        # Prefer weights-resident (single k step => W1/W2 streamed once per core).
        th = Hp
        while est(tm, th) > vmem_limit and th > 256:
            th = max(256, (th // 2) // 128 * 128)
        while est(tm, th) > vmem_limit and tm > 64:
            tm = max(64, (tm // 2) // 8 * 8)
        while est(tm, th) > vmem_limit and th > 128:
            th -= 128
    else:
        th = min(_round_up(block_hidden, 128), Hp)

    tm = max(8, min(tm, Np8))
    th = max(128, min(th, Hp))
    Hp = _round_up(Hp, th)
    Np = _round_up(N, tm)
    return tm, th, Dp, Hp, Np, vmem_limit


def _ffn_kernel(x_ref, w1_ref, b1_ref, w2_ref, b2_ref, g_ref, beta_ref,
                o_ref, acc_ref, *, d_true, d_pad):
    # x_ref: (tm, Dp)    w1_ref: (Dp, th)   b1_ref: (1, th)
    # w2_ref: (th, Dp)   b2_ref/g_ref/beta_ref: (1, Dp)
    # o_ref: (tm, Dp)    acc_ref: (tm, Dp) f32 fc2 accumulator
    k = pl.program_id(1)
    nk = pl.num_programs(1)

    @pl.when(k == 0)
    def _():
        acc_ref[...] = jnp.zeros_like(acc_ref)

    # fc1 + relu for this hidden chunk; operands stay in their native dtype
    # (bf16 feeds the MXU directly), accumulation in f32.
    h = jnp.dot(x_ref[...], w1_ref[...], preferred_element_type=jnp.float32)
    h = jnp.maximum(h + b1_ref[...].astype(jnp.float32), 0.0)

    # Partial fc2: accumulate into the f32 scratch; cast h back to the weight
    # dtype so a bf16 W2 gets a bf16 MXU pass (no-op for f32 weights).
    acc_ref[...] += jnp.dot(h.astype(w2_ref.dtype), w2_ref[...],
                            preferred_element_type=jnp.float32)

    @pl.when(k == nk - 1)
    def _():
        # TODO(synk): dropout with p > 0 (training mode) not implemented; p = 0.0 => identity.
        x_f32 = x_ref[...].astype(jnp.float32)
        y = acc_ref[...] + b2_ref[...].astype(jnp.float32) + x_f32

        # LayerNorm over the true dim_model.  Padded columns of y are exactly
        # zero (x, W2, b2 padding is zero), so:
        #   mean uses the plain row sum, and
        #   sum((y-mean)^2) over the padded tile over-counts by d_pad*mean^2,
        # which is subtracted exactly -- no iota/where mask needed.
        inv_d = 1.0 / float(d_true)
        mean = jnp.sum(y, axis=-1, keepdims=True) * inv_d
        centered = y - mean
        sq = jnp.sum(centered * centered, axis=-1, keepdims=True)
        if d_pad:  # static
            sq = sq - float(d_pad) * (mean * mean)
        var = sq * inv_d
        inv = jax.lax.rsqrt(var + LN_EPS)
        out = centered * inv * g_ref[...].astype(jnp.float32) \
              + beta_ref[...].astype(jnp.float32)
        o_ref[...] = out.astype(o_ref.dtype)


@functools.partial(jax.jit,
                   static_argnames=("block_rows", "block_hidden", "matmul_dtype"))
def position_feed_forward(x, w1, b1, w2, b2, gamma, beta, *,
                          block_rows=None, block_hidden=None, matmul_dtype=None):
    """x: (B, S, D). Weights use y = x @ W + b convention (W1: (D,H), W2: (H,D)).

    matmul_dtype: optionally cast x/W1/W2 (e.g. jnp.bfloat16) for ~3x faster MXU
    passes with f32 accumulation; default None keeps the model dtype (note: f32
    operands take the slow multi-pass MXU path on all generations).
    """
    B, S, D = x.shape
    H = w1.shape[1]
    N = B * S

    x_bytes = jnp.dtype(matmul_dtype or x.dtype).itemsize
    w_bytes = jnp.dtype(matmul_dtype or w1.dtype).itemsize
    tm, th, Dp, Hp, Np, vmem_limit = _plan_tiles(
        N, D, H, x_bytes, w_bytes, block_rows, block_hidden)

    out_dtype = x.dtype
    if matmul_dtype is not None:
        # Residual / epilogue still run in f32; the residual path uses the cast x.
        x, w1, w2 = (a.astype(matmul_dtype) for a in (x, w1, w2))

    # --- build (possibly padded) 2-D views; skip copies when already tile-friendly ---
    xr = x.reshape(N, D)
    if Np != N or Dp != D:
        x2 = jnp.zeros((Np, Dp), x.dtype).at[:N, :D].set(xr)
    else:
        x2 = xr
    if Dp != D or Hp != H:
        w1p = jnp.zeros((Dp, Hp), w1.dtype).at[:D, :H].set(w1)
        w2p = jnp.zeros((Hp, Dp), w2.dtype).at[:H, :D].set(w2)
    else:
        w1p, w2p = w1, w2
    b1p = b1.reshape(1, H) if Hp == H else jnp.zeros((1, Hp), b1.dtype).at[0, :H].set(b1)
    b2p = b2.reshape(1, D) if Dp == D else jnp.zeros((1, Dp), b2.dtype).at[0, :D].set(b2)
    gp = gamma.reshape(1, D) if Dp == D else jnp.zeros((1, Dp), gamma.dtype).at[0, :D].set(gamma)
    bp = beta.reshape(1, D) if Dp == D else jnp.zeros((1, Dp), beta.dtype).at[0, :D].set(beta)

    grid = (Np // tm, Hp // th)  # (row tiles : parallel, hidden chunks : reduction)

    out = pl.pallas_call(
        functools.partial(_ffn_kernel, d_true=D, d_pad=Dp - D),
        out_shape=jax.ShapeDtypeStruct((Np, Dp), out_dtype),
        grid_spec=pltpu.PrefetchScalarGridSpec(
            num_scalar_prefetch=0,
            grid=grid,
            in_specs=[
                pl.BlockSpec((tm, Dp), lambda i, k: (i, 0)),   # x row-tile (resident over k)
                pl.BlockSpec((Dp, th), lambda i, k: (0, k)),   # W1 hidden chunk
                pl.BlockSpec((1, th),  lambda i, k: (0, k)),   # b1 chunk
                pl.BlockSpec((th, Dp), lambda i, k: (k, 0)),   # W2 hidden chunk
                pl.BlockSpec((1, Dp),  lambda i, k: (0, 0)),   # b2
                pl.BlockSpec((1, Dp),  lambda i, k: (0, 0)),   # gamma
                pl.BlockSpec((1, Dp),  lambda i, k: (0, 0)),   # beta
            ],
            out_specs=pl.BlockSpec((tm, Dp), lambda i, k: (i, 0)),
            scratch_shapes=[pltpu.VMEM((tm, Dp), jnp.float32)],
        ),
        compiler_params=pltpu.CompilerParams(
            dimension_semantics=("parallel", "arbitrary"),
            vmem_limit_bytes=vmem_limit,
        ),
    )(x2, w1p, b1p, w2p, b2p, gp, bp)

    if Np != N or Dp != D:
        out = out[:N, :D]
    return out.reshape(B, S, D)


def _reference(x, w1, b1, w2, b2, gamma, beta):
    xf = x.astype(jnp.float32)
    h = jnp.maximum(xf @ w1.astype(jnp.float32) + b1, 0.0)
    y = h @ w2.astype(jnp.float32) + b2
    y = y + xf
    mean = jnp.mean(y, axis=-1, keepdims=True)
    var = jnp.mean((y - mean) ** 2, axis=-1, keepdims=True)
    return (y - mean) * jax.lax.rsqrt(var + LN_EPS) * gamma + beta


def _make_params(key, D, H):
    k1, k2, k3, k4 = jax.random.split(key, 4)
    bound1 = 1.0 / (D ** 0.5)
    w1 = jax.random.uniform(k1, (D, H), jnp.float32, -bound1, bound1)
    b1 = jax.random.uniform(k2, (H,), jnp.float32, -bound1, bound1)
    bound2 = 1.0 / (H ** 0.5)
    w2 = jax.random.uniform(k3, (H, D), jnp.float32, -bound2, bound2)
    b2 = jax.random.uniform(k4, (D,), jnp.float32, -bound2, bound2)
    gamma = jnp.ones((D,), jnp.float32)
    beta = jnp.zeros((D,), jnp.float32)
    return w1, b1, w2, b2, gamma, beta


if __name__ == "__main__":
    key = jax.random.PRNGKey(0)

    # Case 1: small "nice" shapes (batch=2, seq=8, dim_model=32, hidden=64).
    B, S, D, H = 2, 8, 32, 64
    kx, kp = jax.random.split(key)
    x = jax.random.normal(kx, (B, S, D), dtype=jnp.float32)
    w1, b1, w2, b2, gamma, beta = _make_params(kp, D, H)
    out = jax.block_until_ready(position_feed_forward(x, w1, b1, w2, b2, gamma, beta))
    ref = _reference(x, w1, b1, w2, b2, gamma, beta)
    assert out.shape == (B, S, D)
    assert jnp.allclose(out, ref, atol=1e-4, rtol=1e-4), "mismatch vs reference (case 1)"

    # Case 2: awkward shapes exercising the row/D/H padding path.
    B2, S2, D2, H2 = 3, 5, 48, 96
    kx2, kp2 = jax.random.split(kp)
    x2 = jax.random.normal(kx2, (B2, S2, D2), dtype=jnp.float32)
    p2 = _make_params(kp2, D2, H2)
    out2 = jax.block_until_ready(position_feed_forward(x2, *p2))
    ref2 = _reference(x2, *p2)
    assert out2.shape == (B2, S2, D2)
    assert jnp.allclose(out2, ref2, atol=1e-4, rtol=1e-4), "mismatch vs reference (case 2)"

    # Case 3: fully aligned shapes exercising the zero-copy (no padding) fast path.
    B3, S3, D3, H3 = 2, 16, 128, 128
    kx3, kp3 = jax.random.split(kp2)
    x3 = jax.random.normal(kx3, (B3, S3, D3), dtype=jnp.float32)
    p3 = _make_params(kp3, D3, H3)
    out3 = jax.block_until_ready(position_feed_forward(x3, *p3))
    ref3 = _reference(x3, *p3)
    assert out3.shape == (B3, S3, D3)
    assert jnp.allclose(out3, ref3, atol=1e-3, rtol=1e-3), "mismatch vs reference (case 3)"

    print("KERNEL_OK")
</pallas_src>

<mosaic_0001>
module attributes {stable_mosaic.version = 11 : i64} {
  func.func @_ffn_kernel(%arg0: i32, %arg1: i32, %arg2: memref<8x256xf32, #tpu.memory_space<vmem>>, %arg3: memref<256x256xf32, #tpu.memory_space<vmem>>, %arg4: memref<1x256xf32, #tpu.memory_space<vmem>>, %arg5: memref<256x256xf32, #tpu.memory_space<vmem>>, %arg6: memref<1x256xf32, #tpu.memory_space<vmem>>, %arg7: memref<1x256xf32, #tpu.memory_space<vmem>>, %arg8: memref<1x256xf32, #tpu.memory_space<vmem>>, %arg9: memref<8x256xf32, #tpu.memory_space<vmem>>, %arg10: memref<8x256xf32, #tpu.memory_space<vmem>>) attributes {dimension_semantics = [#tpu.dimension_semantics<parallel>, #tpu.dimension_semantics<arbitrary>], iteration_bounds = array<i64: 2, 1>, scalar_prefetch = 0 : i64, scratch_operands = 1 : i64, tpu.core_type = #tpu.core_type<tc>, window_params = [{transform_indices = @transform_0, window_bounds = array<i64: 8, 256>}, {transform_indices = @transform_1, window_bounds = array<i64: 256, 256>}, {transform_indices = @transform_2, window_bounds = array<i64: 1, 256>}, {transform_indices = @transform_3, window_bounds = array<i64: 256, 256>}, {pipeline_mode = #tpu.pipeline_mode<synchronous>, transform_indices = @transform_4, window_bounds = array<i64: 1, 256>}, {pipeline_mode = #tpu.pipeline_mode<synchronous>, transform_indices = @transform_5, window_bounds = array<i64: 1, 256>}, {pipeline_mode = #tpu.pipeline_mode<synchronous>, transform_indices = @transform_6, window_bounds = array<i64: 1, 256>}, {transform_indices = @transform_7, window_bounds = array<i64: 8, 256>}]} {
    %c0_i32 = arith.constant 0 : i32
    %0 = arith.cmpi eq, %arg1, %c0_i32 : i32
    %1 = arith.extui %0 : i1 to i32
    %c0_i32_0 = arith.constant 0 : i32
    %2 = arith.cmpi ne, %1, %c0_i32_0 : i32
    scf.if %2 {
      %cst_16 = arith.constant 0.000000e+00 : f32
      %19 = vector.broadcast %cst_16 : f32 to vector<8x256xf32>
      %c0_17 = arith.constant 0 : index
      %c0_18 = arith.constant 0 : index
      %20 = vector.load %arg10[%c0_17, %c0_18] : memref<8x256xf32, #tpu.memory_space<vmem>>, vector<8x256xf32>
      tpu.vector_store %arg10[%c0_17, %c0_18], %19 {strides = array<i32>} : memref<8x256xf32, #tpu.memory_space<vmem>>, vector<8x256xf32>,
    } else {
    }
    %c0 = arith.constant 0 : index
    %c0_1 = arith.constant 0 : index
    %3 = vector.load %arg2[%c0, %c0_1] : memref<8x256xf32, #tpu.memory_space<vmem>>, vector<8x256xf32>
    %c0_2 = arith.constant 0 : index
    %c0_3 = arith.constant 0 : index
    %4 = vector.load %arg3[%c0_2, %c0_3] : memref<256x256xf32, #tpu.memory_space<vmem>>, vector<256x256xf32>
    %cst = arith.constant dense<0.000000e+00> : vector<8x256xf32>
    %5 = tpu.matmul %3, %4, %cst {dimension_numbers = #tpu.dot_dimension_numbers<[1], [0], [0], [1], [0, 0, 1, 1], [], []>} : vector<8x256xf32>, vector<256x256xf32>, vector<8x256xf32> -> vector<8x256xf32>
    %c0_4 = arith.constant 0 : index
    %c0_5 = arith.constant 0 : index
    %6 = vector.load %arg4[%c0_4, %c0_5] : memref<1x256xf32, #tpu.memory_space<vmem>>, vector<1x256xf32>
    %7 = vector.broadcast %6 : vector<1x256xf32> to vector<8x256xf32>
    %8 = arith.addf %5, %7 : vector<8x256xf32>
    %cst_6 = arith.constant 0.000000e+00 : f32
    %9 = vector.broadcast %cst_6 : f32 to vector<8x256xf32>
    %10 = arith.maximumf %8, %9 : vector<8x256xf32>
    %c0_7 = arith.constant 0 : index
    %c0_8 = arith.constant 0 : index
    %11 = vector.load %arg10[%c0_7, %c0_8] : memref<8x256xf32, #tpu.memory_space<vmem>>, vector<8x256xf32>
    %c0_9 = arith.constant 0 : index
    %c0_10 = arith.constant 0 : index
    %12 = vector.load %arg5[%c0_9, %c0_10] : memref<256x256xf32, #tpu.memory_space<vmem>>, vector<256x256xf32>
    %cst_11 = arith.constant dense<0.000000e+00> : vector<8x256xf32>
    %13 = tpu.matmul %10, %12, %cst_11 {dimension_numbers = #tpu.dot_dimension_numbers<[1], [0], [0], [1], [0, 0, 1, 1], [], []>} : vector<8x256xf32>, vector<256x256xf32>, vector<8x256xf32> -> vector<8x256xf32>
    %14 = arith.addf %11, %13 : vector<8x256xf32>
    %c0_12 = arith.constant 0 : index
    %c0_13 = arith.constant 0 : index
    %15 = vector.load %arg10[%c0_12, %c0_13] : memref<8x256xf32, #tpu.memory_space<vmem>>, vector<8x256xf32>
    tpu.vector_store %arg10[%c0_12, %c0_13], %14 {strides = array<i32>} : memref<8x256xf32, #tpu.memory_space<vmem>>, vector<8x256xf32>,
    %c0_i32_14 = arith.constant 0 : i32
    %16 = arith.cmpi eq, %arg1, %c0_i32_14 : i32
    %17 = arith.extui %16 : i1 to i32
    %c0_i32_15 = arith.constant 0 : i32
    %18 = arith.cmpi ne, %17, %c0_i32_15 : i32
    scf.if %18 {
      %c0_16 = arith.constant 0 : index
      %c0_17 = arith.constant 0 : index
      %19 = vector.load %arg2[%c0_16, %c0_17] : memref<8x256xf32, #tpu.memory_space<vmem>>, vector<8x256xf32>
      %c0_18 = arith.constant 0 : index
      %c0_19 = arith.constant 0 : index
      %20 = vector.load %arg10[%c0_18, %c0_19] : memref<8x256xf32, #tpu.memory_space<vmem>>, vector<8x256xf32>
      %c0_20 = arith.constant 0 : index
      %c0_21 = arith.constant 0 : index
      %21 = vector.load %arg6[%c0_20, %c0_21] : memref<1x256xf32, #tpu.memory_space<vmem>>, vector<1x256xf32>
      %22 = vector.broadcast %21 : vector<1x256xf32> to vector<8x256xf32>
      %23 = arith.addf %20, %22 : vector<8x256xf32>
      %24 = arith.addf %23, %19 : vector<8x256xf32>
      %cst_22 = arith.constant dense<0.000000e+00> : vector<8xf32>
      %25 = vector.multi_reduction <add>, %24, %cst_22 [1] : vector<8x256xf32> to vector<8xf32>
      %26 = vector.shape_cast %25 : vector<8xf32> to vector<8x1xf32>
      %cst_23 = arith.constant 3.125000e-02 : f32
      %27 = vector.broadcast %cst_23 : f32 to vector<8x1xf32>
      %28 = arith.mulf %26, %27 : vector<8x1xf32>
      %29 = vector.broadcast %28 : vector<8x1xf32> to vector<8x256xf32>
      %30 = arith.subf %24, %29 : vector<8x256xf32>
      %31 = arith.mulf %30, %30 : vector<8x256xf32>
      %cst_24 = arith.constant dense<0.000000e+00> : vector<8xf32>
      %32 = vector.multi_reduction <add>, %31, %cst_24 [1] : vector<8x256xf32> to vector<8xf32>
      %33 = vector.shape_cast %32 : vector<8xf32> to vector<8x1xf32>
      %34 = arith.mulf %28, %28 : vector<8x1xf32>
      %cst_25 = arith.constant 2.240000e+02 : f32
      %35 = vector.broadcast %cst_25 : f32 to vector<8x1xf32>
      %36 = arith.mulf %35, %34 : vector<8x1xf32>
      %37 = arith.subf %33, %36 : vector<8x1xf32>
      %cst_26 = arith.constant 3.125000e-02 : f32
      %38 = vector.broadcast %cst_26 : f32 to vector<8x1xf32>
      %39 = arith.mulf %37, %38 : vector<8x1xf32>
      %cst_27 = arith.constant 9.99999974E-6 : f32
      %40 = vector.broadcast %cst_27 : f32 to vector<8x1xf32>
      %41 = arith.addf %39, %40 : vector<8x1xf32>
      %42 = math.rsqrt %41 : vector<8x1xf32>
      %43 = vector.broadcast %42 : vector<8x1xf32> to vector<8x256xf32>
      %44 = arith.mulf %30, %43 : vector<8x256xf32>
      %c0_28 = arith.constant 0 : index
      %c0_29 = arith.constant 0 : index
      %45 = vector.load %arg7[%c0_28, %c0_29] : memref<1x256xf32, #tpu.memory_space<vmem>>, vector<1x256xf32>
      %46 = vector.broadcast %45 : vector<1x256xf32> to vector<8x256xf32>
      %47 = arith.mulf %44, %46 : vector<8x256xf32>
      %c0_30 = arith.constant 0 : index
      %c0_31 = arith.constant 0 : index
      %48 = vector.load %arg8[%c0_30, %c0_31] : memref<1x256xf32, #tpu.memory_space<vmem>>, vector<1x256xf32>
      %49 = vector.broadcast %48 : vector<1x256xf32> to vector<8x256xf32>
      %50 = arith.addf %47, %49 : vector<8x256xf32>
      %c0_32 = arith.constant 0 : index
      %c0_33 = arith.constant 0 : index
      %51 = vector.load %arg9[%c0_32, %c0_33] : memref<8x256xf32, #tpu.memory_space<vmem>>, vector<8x256xf32>
      tpu.vector_store %arg9[%c0_32, %c0_33], %50 {strides = array<i32>} : memref<8x256xf32, #tpu.memory_space<vmem>>, vector<8x256xf32>,
    } else {
    }
    return
  }
  func.func @transform_0(%arg0: i32, %arg1: i32) -> (i32, i32) {
    %c0_i32 = arith.constant 0 : i32
    %c0_i32_0 = arith.constant 0 : i32
    return %arg0, %c0_i32 : i32, i32
  }
  func.func @transform_1(%arg0: i32, %arg1: i32) -> (i32, i32) {
    %c0_i32 = arith.constant 0 : i32
    %c0_i32_0 = arith.constant 0 : i32
    return %c0_i32, %arg1 : i32, i32
  }
  func.func @transform_2(%arg0: i32, %arg1: i32) -> (i32, i32) {
    %c0_i32 = arith.constant 0 : i32
    %c0_i32_0 = arith.constant 0 : i32
    return %c0_i32, %arg1 : i32, i32
  }
  func.func @transform_3(%arg0: i32, %arg1: i32) -> (i32, i32) {
    %c0_i32 = arith.constant 0 : i32
    %c0_i32_0 = arith.constant 0 : i32
    return %arg1, %c0_i32 : i32, i32
  }
  func.func @transform_4(%arg0: i32, %arg1: i32) -> (i32, i32) {
    %c0_i32 = arith.constant 0 : i32
    %c0_i32_0 = arith.constant 0 : i32
    %c0_i32_1 = arith.constant 0 : i32
    return %c0_i32, %c0_i32_0 : i32, i32
  }
  func.func @transform_5(%arg0: i32, %arg1: i32) -> (i32, i32) {
    %c0_i32 = arith.constant 0 : i32
    %c0_i32_0 = arith.constant 0 : i32
    %c0_i32_1 = arith.constant 0 : i32
    return %c0_i32, %c0_i32_0 : i32, i32
  }
  func.func @transform_6(%arg0: i32, %arg1: i32) -> (i32, i32) {
    %c0_i32 = arith.constant 0 : i32
    %c0_i32_0 = arith.constant 0 : i32
    %c0_i32_1 = arith.constant 0 : i32
    return %c0_i32, %c0_i32_0 : i32, i32
  }
  func.func @transform_7(%arg0: i32, %arg1: i32) -> (i32, i32) {
    %c0_i32 = arith.constant 0 : i32
    %c0_i32_0 = arith.constant 0 : i32
    return %arg0, %c0_i32 : i32, i32
  }
}

</mosaic_0001>

<llo_original>
// kernel: position_feed_forward.1
$region0: #{position_feed_forward.1}
  #allocation0 [shape = 'u32[]', space=smem, size = 0x4, offset = 0x4, fixed_abs, tag = 'smem constant byte address 0x4 - core index']
  #allocation1 [shape = 'u32[144,128]{1,0:T(1,128)}', space=vmem, size = 0x12000, scoped, tag = 'internal scratch']
  #allocation2 [shape = 'f32[8,256]{1,0:T(8,128)}', space=vmem, size = 0x2000, scoped, tag = 'scratch operand']
  %s0 = inlined_call_operand.hbm [shape: f32[16,256], index: 0, kind: input, shape index: {}]
  %s1 = inlined_call_operand.hbm [shape: f32[256,256], index: 1, kind: input, shape index: {}]
  %s2 = inlined_call_operand.hbm [shape: f32[1,256], index: 2, kind: input, shape index: {}]
  %s3 = inlined_call_operand.hbm [shape: f32[256,256], index: 3, kind: input, shape index: {}]
  %s4 = inlined_call_operand.hbm [shape: f32[1,256], index: 4, kind: input, shape index: {}]
  %s5 = inlined_call_operand.hbm [shape: f32[1,256], index: 5, kind: input, shape index: {}]
  %s6 = inlined_call_operand.hbm [shape: f32[1,256], index: 6, kind: input, shape index: {}]
  %s7 = inlined_call_operand.hbm [shape: f32[16,256], index: 7, kind: output, shape index: {}]
  %s8 = sld [smem:[#allocation0]]
  $region97: #{position_feed_forward.1} parent=0
    _
  %s10 = ssub.s32 1, %s8
  %s11 = scalar_select 0, %s10, %s8
  $region1: #{position_feed_forward.1} parent=0
    #allocation3 [shape = 'u8[16384]{0}', space=vmem, size = 0x4000, scoped, tag = 'input window, operand 0']
    #allocation4 [shape = 's32[2]{0}', space=sflag, size = 0x8, scoped, tag = 'scoped memory for position_feed_forward.1']
    #allocation5 [shape = 's32[2]{0}', space=sflag, size = 0x8, scoped, tag = 'scoped memory for position_feed_forward.1']
    #allocation6 [shape = 'u8[262144]{0}', space=vmem, size = 0x40000, scoped, tag = 'input window, operand 1, single buffered']
    #allocation7 [shape = 's32[1]{0}', space=sflag, size = 0x4, scoped, tag = 'scoped memory for position_feed_forward.1']
    #allocation8 [shape = 'u8[1024]{0}', space=vmem, size = 0x400, scoped, tag = 'input window, operand 2, single buffered']
    #allocation9 [shape = 'u8[262144]{0}', space=vmem, size = 0x40000, scoped, tag = 'input window, operand 3, single buffered']
    #allocation10 [shape = 's32[1]{0}', space=sflag, size = 0x4, scoped, tag = 'scoped memory for position_feed_forward.1']
    #allocation11 [shape = 'u8[1024]{0}', space=vmem, size = 0x400, scoped, tag = 'input window, operand 4, single buffered']
    #allocation12 [shape = 'u8[1024]{0}', space=vmem, size = 0x400, scoped, tag = 'input window, operand 5, single buffered']
    #allocation13 [shape = 's32[1]{0}', space=sflag, size = 0x4, scoped, tag = 'scoped memory for position_feed_forward.1']
    #allocation14 [shape = 'u8[1024]{0}', space=vmem, size = 0x400, scoped, tag = 'input window, operand 6, single buffered']
    #allocation15 [shape = 'u8[16384]{0}', space=vmem, size = 0x4000, scoped, tag = 'output window, operand 0']
    %12 = vsyncpa [#allocation4], 0
    %s13 = scalar_lea.sflag [#allocation4], 1
    %14 = vsyncpa %s13, 0
    %15 = vsyncpa [#allocation7], 0
    %16 = vsyncpa [#allocation10], 0
    %17 = vsyncpa [#allocation13], 0
    %18 = vsyncpa [#allocation5], 0
    %s19 = scalar_lea.sflag [#allocation5], 1
    %20 = vsyncpa %s19, 0
    loop: start=0, step=1, limit=4
    $region2: #{position_feed_forward.1} parent=1 // loop_pre_header
      _
    $region3: #{position_feed_forward.1} parent=1 // loop_header
      %s22 = sphi 0, %s26
      %p23 = scmp.ge.s32.totalorder %s22, 4
      %s29 = sphi 0, %s41
      %s30 = sphi 0, %s37
      %s31 = sphi 0, %s29
      %s32 = sphi 0, %s30
      %s33 = sphi 0, %s31
      %s34 = sphi 0, %s32
      %s44 = sphi 0, %s46
      %s47 = sphi 0, %s44
      %s48 = sphi 0, %s47
      %s64 = sphi 0, %s48
      %s70 = sphi 0, %s72
      %s73 = sphi 0, %s70
      %s74 = sphi 0, %s73
      %s90 = sphi 0, %s74
      %s96 = sphi 0, %s98
      %s99 = sphi 0, %s96
      %s100 = sphi 0, %s99
      %s116 = sphi 0, %s100
      %s122 = sphi 0, %s124
      %s125 = sphi 0, %s122
      %s126 = sphi 0, %s125
      %s142 = sphi 0, %s126
      %s146 = sphi 0, %s146
      %s148 = sphi 0, %s146
      %s149 = sphi 0, %s148
      %s163 = sphi 0, %s149
      %s167 = sphi 0, %s167
      %s169 = sphi 0, %s167
      %s170 = sphi 0, %s169
      %s184 = sphi 0, %s170
      %s188 = sphi 0, %s188
      %s190 = sphi 0, %s188
      %s191 = sphi 0, %s190
      %s205 = sphi 0, %s191
      %s211 = sphi 0, %s213
      %s214 = sphi 0, %s211
      %s215 = sphi 0, %s214
      %s231 = sphi 0, %s215
    $region4: #{position_feed_forward.1} parent=1 // loop_header_branch
      %25 = sbr.rel (%p23) target = $region8
    $region5: #{position_feed_forward.1} parent=1 // loop_body
      %s27 = ssub.s32 %s22, 1
      %s28 = ssub.s32 %s22, 2
      %s35 = sadd.s32 1, %s30
      %p36 = scmp.ge.s32.totalorder %s35, 1
      %s37 = scalar_select %p36, 0, %s35
      %s38 = sadd.s32 1, %s29
      %s39 = scalar_select %p36, %s38, %s29
      %p40 = scmp.ge.s32.totalorder %s39, 2
      %s41 = scalar_select %p40, 0, %s39
      %s42 = ssub.s32 %s29, %s41
      %p43 = scmp.eq.s32.totalorder %s42, 0
      %s45 = sadd.s32 %s44, 1
      %s46 = scalar_select %p43, %s44, %s45
      %p49 = pneg %p43
      %p50 = scmp.eq.s32.totalorder %s22, 1
      %p51 = por %p49, %p50
      %p52 = scmp.ne.s32.totalorder %s44, %s47
      %p53 = scmp.eq.s32.totalorder %s22, 0
      %p54 = por %p52, %p53
      %p55 = scmp.ne.s32.totalorder %s44, %s47
      %p56 = scmp.eq.s32.totalorder %s27, 1
      %p57 = por %p55, %p56
      %p58 = scmp.ne.s32.totalorder %s47, %s48
      %p59 = scmp.eq.s32.totalorder %s27, 0
      %p60 = por %p58, %p59
      %p61 = scmp.ne.s32.totalorder %s47, %s48
      %p62 = scmp.eq.s32.totalorder %s28, 1
      %p63 = por %p61, %p62
      %p65 = scmp.ne.s32.totalorder %s48, %s64
      %p66 = scmp.eq.s32.totalorder %s28, 0
      %p67 = por %p65, %p66
      %s68 = ssub.s32 %s30, %s37
      %p69 = scmp.eq.s32.totalorder %s68, 0
      %s71 = sadd.s32 %s70, 1
      %s72 = scalar_select %p69, %s70, %s71
      %p75 = pneg %p69
      %p76 = scmp.eq.s32.totalorder %s22, 1
      %p77 = por %p75, %p76
      %p78 = scmp.ne.s32.totalorder %s70, %s73
      %p79 = scmp.eq.s32.totalorder %s22, 0
      %p80 = por %p78, %p79
      %p81 = scmp.ne.s32.totalorder %s70, %s73
      %p82 = scmp.eq.s32.totalorder %s27, 1
      %p83 = por %p81, %p82
      %p84 = scmp.ne.s32.totalorder %s73, %s74
      %p85 = scmp.eq.s32.totalorder %s27, 0
      %p86 = por %p84, %p85
      %p87 = scmp.ne.s32.totalorder %s73, %s74
      %p88 = scmp.eq.s32.totalorder %s28, 1
      %p89 = por %p87, %p88
      %p91 = scmp.ne.s32.totalorder %s74, %s90
      %p92 = scmp.eq.s32.totalorder %s28, 0
      %p93 = por %p91, %p92
      %s94 = ssub.s32 %s30, %s37
      %p95 = scmp.eq.s32.totalorder %s94, 0
      %s97 = sadd.s32 %s96, 1
      %s98 = scalar_select %p95, %s96, %s97
      %p101 = pneg %p95
      %p102 = scmp.eq.s32.totalorder %s22, 1
      %p103 = por %p101, %p102
      %p104 = scmp.ne.s32.totalorder %s96, %s99
      %p105 = scmp.eq.s32.totalorder %s22, 0
      %p106 = por %p104, %p105
      %p107 = scmp.ne.s32.totalorder %s96, %s99
      %p108 = scmp.eq.s32.totalorder %s27, 1
      %p109 = por %p107, %p108
      %p110 = scmp.ne.s32.totalorder %s99, %s100
      %p111 = scmp.eq.s32.totalorder %s27, 0
      %p112 = por %p110, %p111
      %p113 = scmp.ne.s32.totalorder %s99, %s100
      %p114 = scmp.eq.s32.totalorder %s28, 1
      %p115 = por %p113, %p114
      %p117 = scmp.ne.s32.totalorder %s100, %s116
      %p118 = scmp.eq.s32.totalorder %s28, 0
      %p119 = por %p117, %p118
      %s120 = ssub.s32 %s30, %s37
      %p121 = scmp.eq.s32.totalorder %s120, 0
      %s123 = sadd.s32 %s122, 1
      %s124 = scalar_select %p121, %s122, %s123
      %p127 = pneg %p121
      %p128 = scmp.eq.s32.totalorder %s22, 1
      %p129 = por %p127, %p128
      %p130 = scmp.ne.s32.totalorder %s122, %s125
      %p131 = scmp.eq.s32.totalorder %s22, 0
      %p132 = por %p130, %p131
      %p133 = scmp.ne.s32.totalorder %s122, %s125
      %p134 = scmp.eq.s32.totalorder %s27, 1
      %p135 = por %p133, %p134
      %p136 = scmp.ne.s32.totalorder %s125, %s126
      %p137 = scmp.eq.s32.totalorder %s27, 0
      %p138 = por %p136, %p137
      %p139 = scmp.ne.s32.totalorder %s125, %s126
      %p140 = scmp.eq.s32.totalorder %s28, 1
      %p141 = por %p139, %p140
      %p143 = scmp.ne.s32.totalorder %s126, %s142
      %p144 = scmp.eq.s32.totalorder %s28, 0
      %p145 = por %p143, %p144
      %s147 = sadd.s32 %s146, 1
      %p150 = scmp.eq.s32.totalorder %s22, 1
      %p151 = scmp.ne.s32.totalorder %s146, %s148
      %p152 = scmp.eq.s32.totalorder %s22, 0
      %p153 = por %p151, %p152
      %p154 = scmp.ne.s32.totalorder %s146, %s148
      %p155 = scmp.eq.s32.totalorder %s27, 1
      %p156 = por %p154, %p155
      %p157 = scmp.ne.s32.totalorder %s148, %s149
      %p158 = scmp.eq.s32.totalorder %s27, 0
      %p159 = por %p157, %p158
      %p160 = scmp.ne.s32.totalorder %s148, %s149
      %p161 = scmp.eq.s32.totalorder %s28, 1
      %p162 = por %p160, %p161
      %p164 = scmp.ne.s32.totalorder %s149, %s163
      %p165 = scmp.eq.s32.totalorder %s28, 0
      %p166 = por %p164, %p165
      %s168 = sadd.s32 %s167, 1
      %p171 = scmp.eq.s32.totalorder %s22, 1
      %p172 = scmp.ne.s32.totalorder %s167, %s169
      %p173 = scmp.eq.s32.totalorder %s22, 0
      %p174 = por %p172, %p173
      %p175 = scmp.ne.s32.totalorder %s167, %s169
      %p176 = scmp.eq.s32.totalorder %s27, 1
      %p177 = por %p175, %p176
      %p178 = scmp.ne.s32.totalorder %s169, %s170
      %p179 = scmp.eq.s32.totalorder %s27, 0
      %p180 = por %p178, %p179
      %p181 = scmp.ne.s32.totalorder %s169, %s170
      %p182 = scmp.eq.s32.totalorder %s28, 1
      %p183 = por %p181, %p182
      %p185 = scmp.ne.s32.totalorder %s170, %s184
      %p186 = scmp.eq.s32.totalorder %s28, 0
      %p187 = por %p185, %p186
      %s189 = sadd.s32 %s188, 1
      %p192 = scmp.eq.s32.totalorder %s22, 1
      %p193 = scmp.ne.s32.totalorder %s188, %s190
      %p194 = scmp.eq.s32.totalorder %s22, 0
      %p195 = por %p193, %p194
      %p196 = scmp.ne.s32.totalorder %s188, %s190
      %p197 = scmp.eq.s32.totalorder %s27, 1
      %p198 = por %p196, %p197
      %p199 = scmp.ne.s32.totalorder %s190, %s191
      %p200 = scmp.eq.s32.totalorder %s27, 0
      %p201 = por %p199, %p200
      %p202 = scmp.ne.s32.totalorder %s190, %s191
      %p203 = scmp.eq.s32.totalorder %s28, 1
      %p204 = por %p202, %p203
      %p206 = scmp.ne.s32.totalorder %s191, %s205
      %p207 = scmp.eq.s32.totalorder %s28, 0
      %p208 = por %p206, %p207
      %s209 = ssub.s32 %s29, %s41
      %p210 = scmp.eq.s32.totalorder %s209, 0
      %s212 = sadd.s32 %s211, 1
      %s213 = scalar_select %p210, %s211, %s212
      %p216 = pneg %p210
      %p217 = scmp.eq.s32.totalorder %s22, 1
      %p218 = por %p216, %p217
      %p219 = scmp.ne.s32.totalorder %s211, %s214
      %p220 = scmp.eq.s32.totalorder %s22, 0
      %p221 = por %p219, %p220
      %p222 = scmp.ne.s32.totalorder %s211, %s214
      %p223 = scmp.eq.s32.totalorder %s27, 1
      %p224 = por %p222, %p223
      %p225 = scmp.ne.s32.totalorder %s214, %s215
      %p226 = scmp.eq.s32.totalorder %s27, 0
      %p227 = por %p225, %p226
      %p228 = scmp.ne.s32.totalorder %s214, %s215
      %p229 = scmp.eq.s32.totalorder %s28, 1
      %p230 = por %p228, %p229
      %p232 = scmp.ne.s32.totalorder %s215, %s231
      %p233 = scmp.eq.s32.totalorder %s28, 0
      %p234 = por %p232, %p233
      %p235 = scmp.le.s32.totalorder 1, %s22
      %p236 = scmp.lt.s32.totalorder %s22, 3
      %p237 = pnand %p235, %p236
      %p238 = pneg %p237
      // Predicated region
      $region9: #{position_feed_forward.1} parent=5 // pred_check
        _
      $region10: #{position_feed_forward.1} parent=5 // pred_check_branch
        %240 = sbr.rel (%p237) target = $region12
      $region11: #{position_feed_forward.1} parent=5 // pred_region
        %s241 = ssub.s32 %s22, 1
        // Predicated region
        $region13: #{position_feed_forward.1} parent=11 // pred_check
          %p242 = pneg %p86
        $region14: #{position_feed_forward.1} parent=11 // pred_check_branch
          %244 = sbr.rel (%p242) target = $region16
        $region15: #{position_feed_forward.1} parent=11 // pred_region
          %s245 = smul.u32 2, %s32
          %s247 = ssub.s32 8192, 8192
          %248 = vsyncadd [#allocation7], %s247
          %s249 = smul.addr %s245, 128
          %s250 = scalar_lea.hbm %s1, %s249
          %s251 = sshll.u32 [#allocation6], 4
          %s252 = int_to_ptr.vmem [resolvable:$true] %s251
          %257 = dma.hbm_to_vmem [thread:$0]  %s250, 8192, %s252, [#allocation7], 256, 256, 16
        $region16: #{position_feed_forward.1} parent=11 // pred_fallthru
          _
        // Predicated region
        $region17: #{position_feed_forward.1} parent=11 // pred_check
          %p258 = pneg %p112
        $region18: #{position_feed_forward.1} parent=11 // pred_check_branch
          %260 = sbr.rel (%p258) target = $region20
        $region19: #{position_feed_forward.1} parent=11 // pred_region
          %s261 = smul.u32 2, %s32
          %s263 = ssub.s32 32, 32
          %264 = vsyncadd [#allocation7], %s263
          %s265 = smul.addr %s261, 16
          %s266 = scalar_lea.hbm %s2, %s265
          %s268 = sshll.u32 [#allocation8], 4
          %s269 = int_to_ptr.vmem [resolvable:$true] %s268
          %271 = dma.hbm_to_vmem [thread:$0]  %s266, 32, %s269, [#allocation7]
        $region20: #{position_feed_forward.1} parent=11 // pred_fallthru
          _
        // Predicated region
        $region21: #{position_feed_forward.1} parent=11 // pred_check
          %p272 = pneg %p138
        $region22: #{position_feed_forward.1} parent=11 // pred_check_branch
          %274 = sbr.rel (%p272) target = $region24
        $region23: #{position_feed_forward.1} parent=11 // pred_region
          %s275 = smul.u32 32, %s32
          %s277 = ssub.s32 8192, 8192
          %278 = vsyncadd [#allocation10], %s277
          %s279 = smul.addr %s275, 2
          %s280 = smul.addr %s279, 128
          %s281 = scalar_lea.hbm %s3, %s280
          %s282 = sshll.u32 [#allocation9], 4
          %s283 = int_to_ptr.vmem [resolvable:$true] %s282
          %288 = dma.hbm_to_vmem [thread:$0]  %s281, 8192, %s283, [#allocation10], 256, 256, 16
        $region24: #{position_feed_forward.1} parent=11 // pred_fallthru
          _
        // Predicated region
        $region25: #{position_feed_forward.1} parent=11 // pred_check
          %p289 = pneg %p159
        $region26: #{position_feed_forward.1} parent=11 // pred_check_branch
          %291 = sbr.rel (%p289) target = $region28
        $region27: #{position_feed_forward.1} parent=11 // pred_region
          %s293 = ssub.s32 32, 32
          %294 = vsyncadd [#allocation10], %s293
          %s296 = sshll.u32 [#allocation11], 4
          %s297 = int_to_ptr.vmem [resolvable:$true] %s296
          %299 = dma.hbm_to_vmem [thread:$0]  %s4, 32, %s297, [#allocation10]
        $region28: #{position_feed_forward.1} parent=11 // pred_fallthru
          _
        // Predicated region
        $region29: #{position_feed_forward.1} parent=11 // pred_check
          %p300 = pneg %p180
        $region30: #{position_feed_forward.1} parent=11 // pred_check_branch
          %302 = sbr.rel (%p300) target = $region32
        $region31: #{position_feed_forward.1} parent=11 // pred_region
          %s304 = ssub.s32 32, 32
          %305 = vsyncadd [#allocation13], %s304
          %s307 = sshll.u32 [#allocation12], 4
          %s308 = int_to_ptr.vmem [resolvable:$true] %s307
          %310 = dma.hbm_to_vmem [thread:$0]  %s5, 32, %s308, [#allocation13]
        $region32: #{position_feed_forward.1} parent=11 // pred_fallthru
          _
        // Predicated region
        $region33: #{position_feed_forward.1} parent=11 // pred_check
          %p311 = pneg %p201
        $region34: #{position_feed_forward.1} parent=11 // pred_check_branch
          %313 = sbr.rel (%p311) target = $region36
        $region35: #{position_feed_forward.1} parent=11 // pred_region
          %s315 = ssub.s32 32, 32
          %316 = vsyncadd [#allocation13], %s315
          %s318 = sshll.u32 [#allocation14], 4
          %s319 = int_to_ptr.vmem [resolvable:$true] %s318
          %321 = dma.hbm_to_vmem [thread:$0]  %s6, 32, %s319, [#allocation13]
        $region36: #{position_feed_forward.1} parent=11 // pred_fallthru
          _
      $region12: #{position_feed_forward.1} parent=5 // pred_fallthru
        _
      %p322 = scmp.lt.s32.totalorder %s22, 2
      // Predicated region
      $region37: #{position_feed_forward.1} parent=5 // pred_check
        %p323 = pneg %p322
      $region38: #{position_feed_forward.1} parent=5 // pred_check_branch
        %325 = sbr.rel (%p323) target = $region40
      $region39: #{position_feed_forward.1} parent=5 // pred_region
        // Predicated region
        $region41: #{position_feed_forward.1} parent=39 // pred_check
          %p326 = pneg %p54
        $region42: #{position_feed_forward.1} parent=39 // pred_check_branch
          %328 = sbr.rel (%p326) target = $region44
        $region43: #{position_feed_forward.1} parent=39 // pred_region
          %s329 = sand.u32 %s44, 1
          %s330 = scalar_lea.sflag [#allocation4], %s329
          %s331 = sand.u32 %s44, 1
          %s332 = smul.addr %s331, 16
          %s333 = scalar_lea.vmem [#allocation3], %s332
          %s335 = ssub.s32 256, 256
          %336 = vsyncadd %s330, %s335
          %s337 = smul.addr %s29, 2
          %s338 = smul.addr %s337, 128
          %s339 = scalar_lea.hbm %s0, %s338
          %s341 = sshll.u32 %s333, 4
          %s342 = int_to_ptr.vmem [resolvable:$true] %s341
          %344 = dma.hbm_to_vmem [thread:$0]  %s339, 256, %s342, %s330
        $region44: #{position_feed_forward.1} parent=39 // pred_fallthru
          _
      $region40: #{position_feed_forward.1} parent=5 // pred_fallthru
        _
      %p345 = scmp.le.s32.totalorder 1, %s22
      %p346 = scmp.lt.s32.totalorder %s22, 3
      %p347 = pnand %p345, %p346
      %p348 = pneg %p347
      // Predicated region
      $region45: #{position_feed_forward.1} parent=5 // pred_check
        _
      $region46: #{position_feed_forward.1} parent=5 // pred_check_branch
        %350 = sbr.rel (%p347) target = $region48
      $region47: #{position_feed_forward.1} parent=5 // pred_region
        %s351 = ssub.s32 %s22, 1
        %s352 = sand.u32 %s47, 1
        %s353 = scalar_lea.sflag [#allocation4], %s352
        %s354 = sand.u32 %s47, 1
        %s355 = smul.addr %s354, 16
        %s356 = scalar_lea.vmem [#allocation3], %s355
        // Predicated region
        $region49: #{position_feed_forward.1} parent=47 // pred_check
          %p357 = pneg %p60
        $region50: #{position_feed_forward.1} parent=47 // pred_check_branch
          %359 = sbr.rel (%p357) target = $region52
        $region51: #{position_feed_forward.1} parent=47 // pred_region
          %360 = dma.done %s353, 256
        $region52: #{position_feed_forward.1} parent=47 // pred_fallthru
          _
        // Predicated region
        $region53: #{position_feed_forward.1} parent=47 // pred_check
          %p361 = pneg %p86
        $region54: #{position_feed_forward.1} parent=47 // pred_check_branch
          %363 = sbr.rel (%p361) target = $region56
        $region55: #{position_feed_forward.1} parent=47 // pred_region
          %364 = dma.done [#allocation7], 8192
        $region56: #{position_feed_forward.1} parent=47 // pred_fallthru
          _
        // Predicated region
        $region57: #{position_feed_forward.1} parent=47 // pred_check
          %p365 = pneg %p112
        $region58: #{position_feed_forward.1} parent=47 // pred_check_branch
          %367 = sbr.rel (%p365) target = $region60
        $region59: #{position_feed_forward.1} parent=47 // pred_region
          %368 = dma.done [#allocation7], 32
        $region60: #{position_feed_forward.1} parent=47 // pred_fallthru
          _
        // Predicated region
        $region61: #{position_feed_forward.1} parent=47 // pred_check
          %p369 = pneg %p138
        $region62: #{position_feed_forward.1} parent=47 // pred_check_branch
          %371 = sbr.rel (%p369) target = $region64
        $region63: #{position_feed_forward.1} parent=47 // pred_region
          %372 = dma.done [#allocation10], 8192
        $region64: #{position_feed_forward.1} parent=47 // pred_fallthru
          _
        // Predicated region
        $region65: #{position_feed_forward.1} parent=47 // pred_check
          %p373 = pneg %p159
        $region66: #{position_feed_forward.1} parent=47 // pred_check_branch
          %375 = sbr.rel (%p373) target = $region68
        $region67: #{position_feed_forward.1} parent=47 // pred_region
          %376 = dma.done [#allocation10], 32
        $region68: #{position_feed_forward.1} parent=47 // pred_fallthru
          _
        // Predicated region
        $region69: #{position_feed_forward.1} parent=47 // pred_check
          %p377 = pneg %p180
        $region70: #{position_feed_forward.1} parent=47 // pred_check_branch
          %379 = sbr.rel (%p377) target = $region72
        $region71: #{position_feed_forward.1} parent=47 // pred_region
          %380 = dma.done [#allocation13], 32
        $region72: #{position_feed_forward.1} parent=47 // pred_fallthru
          _
        // Predicated region
        $region73: #{position_feed_forward.1} parent=47 // pred_check
          %p381 = pneg %p201
        $region74: #{position_feed_forward.1} parent=47 // pred_check_branch
          %383 = sbr.rel (%p381) target = $region76
        $region75: #{position_feed_forward.1} parent=47 // pred_region
          %384 = dma.done [#allocation13], 32
        $region76: #{position_feed_forward.1} parent=47 // pred_fallthru
          _
        %s385 = sand.u32 %s47, 1
        %s386 = scalar_lea.sflag [#allocation4], %s385
        %s387 = sand.u32 %s47, 1
        %s388 = smul.addr %s387, 16
        %s389 = scalar_lea.vmem [#allocation3], %s388
        %p390 = pneg %p60
        %p391 = pneg %p57
        %p392 = pneg %p86
        %p393 = pneg %p83
        %p394 = pneg %p112
        %p395 = pneg %p109
        %p396 = pneg %p138
        %p397 = pneg %p135
        %p398 = pneg %p159
        %p399 = pneg %p156
        %p400 = pneg %p180
        %p401 = pneg %p177
        %p402 = pneg %p201
        %p403 = pneg %p198
        %p404 = pneg %p227
        %p405 = pneg %p224
        %s406 = sand.u32 %s214, 1
        %s407 = scalar_lea.sflag [#allocation5], %s406
        %s408 = sand.u32 %s214, 1
        %s409 = smul.addr %s408, 16
        %s410 = scalar_lea.vmem [#allocation15], %s409
        %s411 = smul.u32 2, %s32
        %s412 = smul.u32 2, %s32
        %s413 = smul.u32 32, %s32
        %p414 = scmp.eq.s32.totalorder %s32, 0
        // Predicated region
        $region77: #{position_feed_forward.1} parent=47 // pred_check
          %p415 = pneg %p414
        $region78: #{position_feed_forward.1} parent=47 // pred_check_branch
          %417 = sbr.rel (%p415) target = $region80
        $region79: #{position_feed_forward.1} parent=47 // pred_region
          %418 = vst [vmem:[#allocation2] sm:$0xff] 0.0
          %419 = vst [vmem:[#allocation2 + $0x8] sm:$0xff] 0.0
        $region80: #{position_feed_forward.1} parent=47 // pred_fallthru
          _
        %v420 = vld [vmem:[%s356] sm:$0xff]
        %v421 = vld [vmem:[%s356 + $0x8] sm:$0xff]
        %v422 = vld [vmem:[#allocation6] sm:$0xff]
        %v423 = vld [vmem:[#allocation6 + $0x8] sm:$0xff]
        %v424 = vld [vmem:[#allocation6 + $0x10] sm:$0xff]
        %v425 = vld [vmem:[#allocation6 + $0x18] sm:$0xff]
        %v426 = vld [vmem:[#allocation6 + $0x20] sm:$0xff]
        %v427 = vld [vmem:[#allocation6 + $0x28] sm:$0xff]
        %v428 = vld [vmem:[#allocation6 + $0x30] sm:$0xff]
        %v429 = vld [vmem:[#allocation6 + $0x38] sm:$0xff]
        %v430 = vld [vmem:[#allocation6 + $0x40] sm:$0xff]
        %v431 = vld [vmem:[#allocation6 + $0x48] sm:$0xff]
        %v432 = vld [vmem:[#allocation6 + $0x50] sm:$0xff]
        %v433 = vld [vmem:[#allocation6 + $0x58] sm:$0xff]
        %v434 = vld [vmem:[#allocation6 + $0x60] sm:$0xff]
        %v435 = vld [vmem:[#allocation6 + $0x68] sm:$0xff]
        %v436 = vld [vmem:[#allocation6 + $0x70] sm:$0xff]
        %v437 = vld [vmem:[#allocation6 + $0x78] sm:$0xff]
        %v438 = vld [vmem:[#allocation6 + $0x80] sm:$0xff]
        %v439 = vld [vmem:[#allocation6 + $0x88] sm:$0xff]
        %v440 = vld [vmem:[#allocation6 + $0x90] sm:$0xff]
        %v441 = vld [vmem:[#allocation6 + $0x98] sm:$0xff]
        %v442 = vld [vmem:[#allocation6 + $0xa0] sm:$0xff]
        %v443 = vld [vmem:[#allocation6 + $0xa8] sm:$0xff]
        %v444 = vld [vmem:[#allocation6 + $0xb0] sm:$0xff]
        %v445 = vld [vmem:[#allocation6 + $0xb8] sm:$0xff]
        %v446 = vld [vmem:[#allocation6 + $0xc0] sm:$0xff]
        %v447 = vld [vmem:[#allocation6 + $0xc8] sm:$0xff]
        %v448 = vld [vmem:[#allocation6 + $0xd0] sm:$0xff]
        %v449 = vld [vmem:[#allocation6 + $0xd8] sm:$0xff]
        %v450 = vld [vmem:[#allocation6 + $0xe0] sm:$0xff]
        %v451 = vld [vmem:[#allocation6 + $0xe8] sm:$0xff]
        %v452 = vld [vmem:[#allocation6 + $0xf0] sm:$0xff]
        %v453 = vld [vmem:[#allocation6 + $0xf8] sm:$0xff]
        %v454 = vld [vmem:[#allocation6 + $0x100] sm:$0xff]
        %v455 = vld [vmem:[#allocation6 + $0x108] sm:$0xff]
        %v456 = vld [vmem:[#allocation6 + $0x110] sm:$0xff]
        %v457 = vld [vmem:[#allocation6 + $0x118] sm:$0xff]
        %v458 = vld [vmem:[#allocation6 + $0x120] sm:$0xff]
        %v459 = vld [vmem:[#allocation6 + $0x128] sm:$0xff]
        %v460 = vld [vmem:[#allocation6 + $0x130] sm:$0xff]
        %v461 = vld [vmem:[#allocation6 + $0x138] sm:$0xff]
        %v462 = vld [vmem:[#allocation6 + $0x140] sm:$0xff]
        %v463 = vld [vmem:[#allocation6 + $0x148] sm:$0xff]
        %v464 = vld [vmem:[#allocation6 + $0x150] sm:$0xff]
        %v465 = vld [vmem:[#allocation6 + $0x158] sm:$0xff]
        %v466 = vld [vmem:[#allocation6 + $0x160] sm:$0xff]
        %v467 = vld [vmem:[#allocation6 + $0x168] sm:$0xff]
        %v468 = vld [vmem:[#allocation6 + $0x170] sm:$0xff]
        %v469 = vld [vmem:[#allocation6 + $0x178] sm:$0xff]
        %v470 = vld [vmem:[#allocation6 + $0x180] sm:$0xff]
        %v471 = vld [vmem:[#allocation6 + $0x188] sm:$0xff]
        %v472 = vld [vmem:[#allocation6 + $0x190] sm:$0xff]
        %v473 = vld [vmem:[#allocation6 + $0x198] sm:$0xff]
        %v474 = vld [vmem:[#allocation6 + $0x1a0] sm:$0xff]
        %v475 = vld [vmem:[#allocation6 + $0x1a8] sm:$0xff]
        %v476 = vld [vmem:[#allocation6 + $0x1b0] sm:$0xff]
        %v477 = vld [vmem:[#allocation6 + $0x1b8] sm:$0xff]
        %v478 = vld [vmem:[#allocation6 + $0x1c0] sm:$0xff]
        %v479 = vld [vmem:[#allocation6 + $0x1c8] sm:$0xff]
        %v480 = vld [vmem:[#allocation6 + $0x1d0] sm:$0xff]
        %v481 = vld [vmem:[#allocation6 + $0x1d8] sm:$0xff]
        %v482 = vld [vmem:[#allocation6 + $0x1e0] sm:$0xff]
        %v483 = vld [vmem:[#allocation6 + $0x1e8] sm:$0xff]
        %v484 = vld [vmem:[#allocation6 + $0x1f0] sm:$0xff]
        %v485 = vld [vmem:[#allocation6 + $0x1f8] sm:$0xff]
        %v486 = vld [vmem:[#allocation8] sm:$0x3]
        %v488 = vlaneseq
        %v489 = vshrl.u32 %v488, 7
        %v490 = vsub.s32 0, %v489
        %v491 = vrot.slane %v486, %v490
        %v492 = vlaneseq
        %v493 = vshrl.u32 %v492, 7
        %v494 = vsub.s32 1, %v493
        %v495 = vrot.slane %v486, %v494
        %498 = vmatprep.subr.mxu0 %v423
        %499 = vmatpush1.msra.mxu0 %v422
        %500 = vmatprep.subr.mxu0 %v425
        %501 = vmatpush1.msra.mxu0 %v424
        %502 = vmatprep.subr.mxu0 %v427
        %503 = vmatpush1.msra.mxu0 %v426
        %504 = vmatprep.subr.mxu0 %v429
        %505 = vmatpush1.msra.mxu0 %v428
        %506 = vmatprep.subr.mxu0 %v431
        %507 = vmatpush1.msra.mxu0 %v430
        %508 = vmatprep.subr.mxu0 %v433
        %509 = vmatpush1.msra.mxu0 %v432
        %510 = vmatprep.subr.mxu0 %v435
        %511 = vmatpush1.msra.mxu0 %v434
        %512 = vmatprep.subr.mxu0 %v437
        %513 = vmatpush1.msra.mxu0 %v436
        %514 = vmatprep.subr.mxu0 %v439
        %515 = vmatpush1.msra.mxu0 %v438
        %516 = vmatprep.subr.mxu0 %v441
        %517 = vmatpush1.msra.mxu0 %v440
        %518 = vmatprep.subr.mxu0 %v443
        %519 = vmatpush1.msra.mxu0 %v442
        %520 = vmatprep.subr.mxu0 %v445
        %521 = vmatpush1.msra.mxu0 %v444
        %522 = vmatprep.subr.mxu0 %v447
        %523 = vmatpush1.msra.mxu0 %v446
        %524 = vmatprep.subr.mxu0 %v449
        %525 = vmatpush1.msra.mxu0 %v448
        %526 = vmatprep.subr.mxu0 %v451
        %527 = vmatpush1.msra.mxu0 %v450
        %528 = vmatprep.subr.mxu0 %v453
        %529 = vmatpush1.msra.mxu0 %v452
        %530 = vmatprep.subr.mxu0 %v455
        %531 = vmatpush1.msra.mxu0 %v454
        %532 = vmatprep.subr.mxu0 %v457
        %533 = vmatpush1.msra.mxu0 %v456
        %534 = vmatprep.subr.mxu0 %v459
        %535 = vmatpush1.msra.mxu0 %v458
        %536 = vmatprep.subr.mxu0 %v461
        %537 = vmatpush1.msra.mxu0 %v460
        %538 = vmatprep.subr.mxu0 %v463
        %539 = vmatpush1.msra.mxu0 %v462
        %540 = vmatprep.subr.mxu0 %v465
        %541 = vmatpush1.msra.mxu0 %v464
        %542 = vmatprep.subr.mxu0 %v467
        %543 = vmatpush1.msra.mxu0 %v466
        %544 = vmatprep.subr.mxu0 %v469
        %545 = vmatpush1.msra.mxu0 %v468
        %546 = vmatprep.subr.mxu0 %v471
        %547 = vmatpush1.msra.mxu0 %v470
        %548 = vmatprep.subr.mxu0 %v473
        %549 = vmatpush1.msra.mxu0 %v472
        %550 = vmatprep.subr.mxu0 %v475
        %551 = vmatpush1.msra.mxu0 %v474
        %552 = vmatprep.subr.mxu0 %v477
        %553 = vmatpush1.msra.mxu0 %v476
        %554 = vmatprep.subr.mxu0 %v479
        %555 = vmatpush1.msra.mxu0 %v478
        %556 = vmatprep.subr.mxu0 %v481
        %557 = vmatpush1.msra.mxu0 %v480
        %558 = vmatprep.subr.mxu0 %v483
        %559 = vmatpush1.msra.mxu0 %v482
        %560 = vmatprep.subr.mxu0 %v485
        %561 = vmatpush1.msra.mxu0 %v484
        %562 = vmatprep.mubr.f32.mxu0 %v421
        %563 = vmatmul.mubr.f32.gmra.mrb[0].mxu0 %v420
        %v564 = vpop.f32.mrb[0].mxu0
        %v565 = vadd.f32 %v491, %v564
        %v566 = vpop.f32.mrb[0].mxu0
        %v567 = vadd.f32 %v495, %v566
        %568 = vdwg.mxu0
        %v569 = vmax.f32 %v565, 0.0
        %v570 = vmax.f32 %v567, 0.0
        %v571 = vld [vmem:[#allocation2] sm:$0xff]
        %v572 = vld [vmem:[#allocation2 + $0x8] sm:$0xff]
        %v573 = vld [vmem:[#allocation9] sm:$0xff]
        %v574 = vld [vmem:[#allocation9 + $0x8] sm:$0xff]
        %v575 = vld [vmem:[#allocation9 + $0x10] sm:$0xff]
        %v576 = vld [vmem:[#allocation9 + $0x18] sm:$0xff]
        %v577 = vld [vmem:[#allocation9 + $0x20] sm:$0xff]
        %v578 = vld [vmem:[#allocation9 + $0x28] sm:$0xff]
        %v579 = vld [vmem:[#allocation9 + $0x30] sm:$0xff]
        %v580 = vld [vmem:[#allocation9 + $0x38] sm:$0xff]
        %v581 = vld [vmem:[#allocation9 + $0x40] sm:$0xff]
        %v582 = vld [vmem:[#allocation9 + $0x48] sm:$0xff]
        %v583 = vld [vmem:[#allocation9 + $0x50] sm:$0xff]
        %v584 = vld [vmem:[#allocation9 + $0x58] sm:$0xff]
        %v585 = vld [vmem:[#allocation9 + $0x60] sm:$0xff]
        %v586 = vld [vmem:[#allocation9 + $0x68] sm:$0xff]
        %v587 = vld [vmem:[#allocation9 + $0x70] sm:$0xff]
        %v588 = vld [vmem:[#allocation9 + $0x78] sm:$0xff]
        %v589 = vld [vmem:[#allocation9 + $0x80] sm:$0xff]
        %v590 = vld [vmem:[#allocation9 + $0x88] sm:$0xff]
        %v591 = vld [vmem:[#allocation9 + $0x90] sm:$0xff]
        %v592 = vld [vmem:[#allocation9 + $0x98] sm:$0xff]
        %v593 = vld [vmem:[#allocation9 + $0xa0] sm:$0xff]
        %v594 = vld [vmem:[#allocation9 + $0xa8] sm:$0xff]
        %v595 = vld [vmem:[#allocation9 + $0xb0] sm:$0xff]
        %v596 = vld [vmem:[#allocation9 + $0xb8] sm:$0xff]
        %v597 = vld [vmem:[#allocation9 + $0xc0] sm:$0xff]
        %v598 = vld [vmem:[#allocation9 + $0xc8] sm:$0xff]
        %v599 = vld [vmem:[#allocation9 + $0xd0] sm:$0xff]
        %v600 = vld [vmem:[#allocation9 + $0xd8] sm:$0xff]
        %v601 = vld [vmem:[#allocation9 + $0xe0] sm:$0xff]
        %v602 = vld [vmem:[#allocation9 + $0xe8] sm:$0xff]
        %v603 = vld [vmem:[#allocation9 + $0xf0] sm:$0xff]
        %v604 = vld [vmem:[#allocation9 + $0xf8] sm:$0xff]
        %v605 = vld [vmem:[#allocation9 + $0x100] sm:$0xff]
        %v606 = vld [vmem:[#allocation9 + $0x108] sm:$0xff]
        %v607 = vld [vmem:[#allocation9 + $0x110] sm:$0xff]
        %v608 = vld [vmem:[#allocation9 + $0x118] sm:$0xff]
        %v609 = vld [vmem:[#allocation9 + $0x120] sm:$0xff]
        %v610 = vld [vmem:[#allocation9 + $0x128] sm:$0xff]
        %v611 = vld [vmem:[#allocation9 + $0x130] sm:$0xff]
        %v612 = vld [vmem:[#allocation9 + $0x138] sm:$0xff]
        %v613 = vld [vmem:[#allocation9 + $0x140] sm:$0xff]
        %v614 = vld [vmem:[#allocation9 + $0x148] sm:$0xff]
        %v615 = vld [vmem:[#allocation9 + $0x150] sm:$0xff]
        %v616 = vld [vmem:[#allocation9 + $0x158] sm:$0xff]
        %v617 = vld [vmem:[#allocation9 + $0x160] sm:$0xff]
        %v618 = vld [vmem:[#allocation9 + $0x168] sm:$0xff]
        %v619 = vld [vmem:[#allocation9 + $0x170] sm:$0xff]
        %v620 = vld [vmem:[#allocation9 + $0x178] sm:$0xff]
        %v621 = vld [vmem:[#allocation9 + $0x180] sm:$0xff]
        %v622 = vld [vmem:[#allocation9 + $0x188] sm:$0xff]
        %v623 = vld [vmem:[#allocation9 + $0x190] sm:$0xff]
        %v624 = vld [vmem:[#allocation9 + $0x198] sm:$0xff]
        %v625 = vld [vmem:[#allocation9 + $0x1a0] sm:$0xff]
        %v626 = vld [vmem:[#allocation9 + $0x1a8] sm:$0xff]
        %v627 = vld [vmem:[#allocation9 + $0x1b0] sm:$0xff]
        %v628 = vld [vmem:[#allocation9 + $0x1b8] sm:$0xff]
        %v629 = vld [vmem:[#allocation9 + $0x1c0] sm:$0xff]
        %v630 = vld [vmem:[#allocation9 + $0x1c8] sm:$0xff]
        %v631 = vld [vmem:[#allocation9 + $0x1d0] sm:$0xff]
        %v632 = vld [vmem:[#allocation9 + $0x1d8] sm:$0xff]
        %v633 = vld [vmem:[#allocation9 + $0x1e0] sm:$0xff]
        %v634 = vld [vmem:[#allocation9 + $0x1e8] sm:$0xff]
        %v635 = vld [vmem:[#allocation9 + $0x1f0] sm:$0xff]
        %v636 = vld [vmem:[#allocation9 + $0x1f8] sm:$0xff]
        %637 = vmatprep.subr.mxu0 %v574
        %638 = vmatpush1.msra.mxu0 %v573
        %639 = vmatprep.subr.mxu0 %v576
        %640 = vmatpush1.msra.mxu0 %v575
        %641 = vmatprep.subr.mxu0 %v578
        %642 = vmatpush1.msra.mxu0 %v577
        %643 = vmatprep.subr.mxu0 %v580
        %644 = vmatpush1.msra.mxu0 %v579
        %645 = vmatprep.subr.mxu0 %v582
        %646 = vmatpush1.msra.mxu0 %v581
        %647 = vmatprep.subr.mxu0 %v584
        %648 = vmatpush1.msra.mxu0 %v583
        %649 = vmatprep.subr.mxu0 %v586
        %650 = vmatpush1.msra.mxu0 %v585
        %651 = vmatprep.subr.mxu0 %v588
        %652 = vmatpush1.msra.mxu0 %v587
        %653 = vmatprep.subr.mxu0 %v590
        %654 = vmatpush1.msra.mxu0 %v589
        %655 = vmatprep.subr.mxu0 %v592
        %656 = vmatpush1.msra.mxu0 %v591
        %657 = vmatprep.subr.mxu0 %v594
        %658 = vmatpush1.msra.mxu0 %v593
        %659 = vmatprep.subr.mxu0 %v596
        %660 = vmatpush1.msra.mxu0 %v595
        %661 = vmatprep.subr.mxu0 %v598
        %662 = vmatpush1.msra.mxu0 %v597
        %663 = vmatprep.subr.mxu0 %v600
        %664 = vmatpush1.msra.mxu0 %v599
        %665 = vmatprep.subr.mxu0 %v602
        %666 = vmatpush1.msra.mxu0 %v601
        %667 = vmatprep.subr.mxu0 %v604
        %668 = vmatpush1.msra.mxu0 %v603
        %669 = vmatprep.subr.mxu0 %v606
        %670 = vmatpush1.msra.mxu0 %v605
        %671 = vmatprep.subr.mxu0 %v608
        %672 = vmatpush1.msra.mxu0 %v607
        %673 = vmatprep.subr.mxu0 %v610
        %674 = vmatpush1.msra.mxu0 %v609
        %675 = vmatprep.subr.mxu0 %v612
        %676 = vmatpush1.msra.mxu0 %v611
        %677 = vmatprep.subr.mxu0 %v614
        %678 = vmatpush1.msra.mxu0 %v613
        %679 = vmatprep.subr.mxu0 %v616
        %680 = vmatpush1.msra.mxu0 %v615
        %681 = vmatprep.subr.mxu0 %v618
        %682 = vmatpush1.msra.mxu0 %v617
        %683 = vmatprep.subr.mxu0 %v620
        %684 = vmatpush1.msra.mxu0 %v619
        %685 = vmatprep.subr.mxu0 %v622
        %686 = vmatpush1.msra.mxu0 %v621
        %687 = vmatprep.subr.mxu0 %v624
        %688 = vmatpush1.msra.mxu0 %v623
        %689 = vmatprep.subr.mxu0 %v626
        %690 = vmatpush1.msra.mxu0 %v625
        %691 = vmatprep.subr.mxu0 %v628
        %692 = vmatpush1.msra.mxu0 %v627
        %693 = vmatprep.subr.mxu0 %v630
        %694 = vmatpush1.msra.mxu0 %v629
        %695 = vmatprep.subr.mxu0 %v632
        %696 = vmatpush1.msra.mxu0 %v631
        %697 = vmatprep.subr.mxu0 %v634
        %698 = vmatpush1.msra.mxu0 %v633
        %699 = vmatprep.subr.mxu0 %v636
        %700 = vmatpush1.msra.mxu0 %v635
        %701 = vmatprep.mubr.f32.mxu0 %v570
        %702 = vmatmul.mubr.f32.gmra.mrb[0].mxu0 %v569
        %v703 = vpop.f32.mrb[0].mxu0
        %v704 = vadd.f32 0.0, %v703
        %v705 = vpop.f32.mrb[0].mxu0
        %v706 = vadd.f32 0.0, %v705
        %707 = vdwg.mxu0
        %v708 = vadd.f32 %v571, %v704
        %v709 = vadd.f32 %v572, %v706
        %710 = vst [vmem:[#allocation2] sm:$0xff] %v708
        %711 = vst [vmem:[#allocation2 + $0x8] sm:$0xff] %v709
        // Predicated region
        $region81: #{position_feed_forward.1} parent=47 // pred_check
          %p712 = pneg %p414
        $region82: #{position_feed_forward.1} parent=47 // pred_check_branch
          %714 = sbr.rel (%p712) target = $region84
        $region83: #{position_feed_forward.1} parent=47 // pred_region
          %v715 = vld [vmem:[%s356] sm:$0xff]
          %v716 = vld [vmem:[%s356 + $0x8] sm:$0xff]
          %v717 = vld [vmem:[#allocation2] sm:$0xff]
          %v718 = vld [vmem:[#allocation2 + $0x8] sm:$0xff]
          %v719 = vld [vmem:[#allocation11] sm:$0x3]
          %v721 = vlaneseq
          %v722 = vshrl.u32 %v721, 7
          %v723 = vsub.s32 0, %v722
          %v724 = vrot.slane %v719, %v723
          %v725 = vlaneseq
          %v726 = vshrl.u32 %v725, 7
          %v727 = vsub.s32 1, %v726
          %v728 = vrot.slane %v719, %v727
          %v731 = vadd.f32 %v717, %v724
          %v732 = vadd.f32 %v718, %v728
          %v733 = vadd.f32 %v731, %v715
          %v734 = vadd.f32 %v732, %v716
          %v735 = vadd.f32 %v733, %v734
          %736 = vadd.xlane.f32.xlu0 %v735
          %v737 = vpop.xlane.xlu0 %736
          %v738 = vmul.f32 %v737, 0.03125
          %v739 = vsub.f32 %v733, %v738
          %v740 = vsub.f32 %v734, %v738
          %v741 = vmul.f32 %v739, %v739
          %v742 = vmul.f32 %v740, %v740
          %v743 = vadd.f32 %v741, %v742
          %744 = vadd.xlane.f32.xlu0 %v743
          %v745 = vpop.xlane.xlu0 %744
          %v746 = vmul.f32 %v738, %v738
          %v747 = vmul.f32 %v746, 224.0
          %v748 = vsub.f32 %v745, %v747
          %v749 = vmul.f32 %v748, 0.03125
          %v750 = vadd.f32 %v749, 1e-05
          %v751 = vrsqrt.pop %v750
          %v752 = vmul.f32 %v739, %v751
          %v753 = vmul.f32 %v740, %v751
          %v754 = vld [vmem:[#allocation12] sm:$0x3]
          %v756 = vlaneseq
          %v757 = vshrl.u32 %v756, 7
          %v758 = vsub.s32 0, %v757
          %v759 = vrot.slane %v754, %v758
          %v760 = vlaneseq
          %v761 = vshrl.u32 %v760, 7
          %v762 = vsub.s32 1, %v761
          %v763 = vrot.slane %v754, %v762
          %v766 = vmul.f32 %v752, %v759
          %v767 = vmul.f32 %v753, %v763
          %v768 = vld [vmem:[#allocation14] sm:$0x3]
          %v770 = vlaneseq
          %v771 = vshrl.u32 %v770, 7
          %v772 = vsub.s32 0, %v771
          %v773 = vrot.slane %v768, %v772
          %v774 = vlaneseq
          %v775 = vshrl.u32 %v774, 7
          %v776 = vsub.s32 1, %v775
          %v777 = vrot.slane %v768, %v776
          %v780 = vadd.f32 %v766, %v773
          %v781 = vadd.f32 %v767, %v777
          %782 = vst [vmem:[%s410] sm:$0xff] %v780
          %783 = vst [vmem:[%s410 + $0x8] sm:$0xff] %v781
        $region84: #{position_feed_forward.1} parent=47 // pred_fallthru
          _
        %s784 = sand.u32 %s214, 1
        %s785 = scalar_lea.sflag [#allocation5], %s784
        %s786 = sand.u32 %s214, 1
        %s787 = smul.addr %s786, 16
        %s788 = scalar_lea.vmem [#allocation15], %s787
        // Predicated region
        $region85: #{position_feed_forward.1} parent=47 // pred_check
          %p789 = pneg %p224
        $region86: #{position_feed_forward.1} parent=47 // pred_check_branch
          %791 = sbr.rel (%p789) target = $region88
        $region87: #{position_feed_forward.1} parent=47 // pred_region
          %s793 = ssub.s32 256, 256
          %794 = vsyncadd %s785, %s793
          %s795 = smul.addr %s31, 2
          %s796 = smul.addr %s795, 128
          %s797 = scalar_lea.hbm %s7, %s796
          %s799 = sshll.u32 %s788, 4
          %s800 = int_to_ptr.vmem [resolvable:$true] %s799
          %802 = dma.vmem_to_hbm [thread:$0]  %s800, 256, %s797, %s785
        $region88: #{position_feed_forward.1} parent=47 // pred_fallthru
          _
      $region48: #{position_feed_forward.1} parent=5 // pred_fallthru
        _
      %p803 = scmp.le.s32.totalorder 2, %s22
      // Predicated region
      $region89: #{position_feed_forward.1} parent=5 // pred_check
        %p804 = pneg %p803
      $region90: #{position_feed_forward.1} parent=5 // pred_check_branch
        %806 = sbr.rel (%p804) target = $region92
      $region91: #{position_feed_forward.1} parent=5 // pred_region
        %s807 = ssub.s32 %s22, 2
        // Predicated region
        $region93: #{position_feed_forward.1} parent=91 // pred_check
          %p808 = pneg %p230
        $region94: #{position_feed_forward.1} parent=91 // pred_check_branch
          %810 = sbr.rel (%p808) target = $region96
        $region95: #{position_feed_forward.1} parent=91 // pred_region
          %s811 = sand.u32 %s215, 1
          %s812 = scalar_lea.sflag [#allocation5], %s811
          %s813 = sand.u32 %s215, 1
          %s814 = smul.addr %s813, 16
          %s815 = scalar_lea.vmem [#allocation15], %s814
          %816 = dma.done %s812, 256
        $region96: #{position_feed_forward.1} parent=91 // pred_fallthru
          _
      $region92: #{position_feed_forward.1} parent=5 // pred_fallthru
        _
    $region6: #{position_feed_forward.1} parent=1 // loop_footer
      %s26 = sadd.s32 1, %s22
    $region7: #{position_feed_forward.1} parent=1 // loop_footer_branch
      %21 = sbr.rel target = $region3
    $region8: #{position_feed_forward.1} parent=1 // loop_exit
      _
    %817 = vsyncpa [#allocation4], 1
    %s818 = scalar_lea.sflag [#allocation4], 1
    %819 = vsyncpa %s818, 1
    %820 = vsyncpa [#allocation7], 1
    %821 = vsyncpa [#allocation10], 1
    %822 = vsyncpa [#allocation13], 1
    %823 = vsyncpa [#allocation5], 1
    %s824 = scalar_lea.sflag [#allocation5], 1
    %825 = vsyncpa %s824, 1

</llo_original>
